<compile_context>
chip_gen: v7x
topology: tpu7x:2x2x1
jax: 0.10.0
libtpu: 0.0.40
codegen_flags: <defaults>
</compile_context>

<pallas_src>
import math
import string

import jax
import jax.numpy as jnp
from jax.experimental import pallas as pl
from jax.experimental.pallas import tpu as pltpu

LANGUAGES = ['Arabic', 'Chinese', 'Czech', 'Dutch', 'English', 'French', 'German',
             'Greek', 'Irish', 'Italian', 'Japanese', 'Korean', 'Polish',
             'Portuguese', 'Russian', 'Scottish', 'Spanish', 'Vietnamese']
LANG_TO_ID = {lang: i for i, lang in enumerate(LANGUAGES)}
NUM_LANG = len(LANGUAGES)

END_TOKEN = '$'
LETTERS = string.ascii_letters + END_TOKEN   # 53 symbols

INPUT_SIZE = len(LETTERS)          # 53
HIDDEN_SIZE = 32
OUTPUT_SIZE = len(LETTERS)         # 53
COMBINED = INPUT_SIZE + HIDDEN_SIZE  # 85

PAD = 128                 # lane padding for the K dims and each output group
N_TOTAL = 2 * PAD         # [hidden group | logits group]
BATCH_BLOCK = 8           # one sublane tile per batch block
NEG_INF = -1e30           # bias for padded logit lanes (exp underflows to 0)


# ----------------------------------------------------------------------------
# Kernel: whole sequence for one (batch block, language), time axis is the grid.
# ----------------------------------------------------------------------------
def rnn_seq_kernel(lid_ref, x_ref, h0_ref, wx_ref, wh_ref, b_ref, out_ref, hid_ref):
    """Fused RNN sequence step.

    lid_ref : SMEM (1,)            scalar-prefetched language id (used by index_maps)
    x_ref   : VMEM (1, B, 128)     padded one-hot letter for step t (bf16)
    h0_ref  : VMEM (B, 128)        padded initial hidden state (f32)
    wx_ref  : VMEM (1, 128, 256)   letter rows of fused [i2h | i2o] weight (bf16)
    wh_ref  : VMEM (1, 128, 256)   hidden rows of fused [i2h | i2o] weight (bf16)
    b_ref   : VMEM (1, 1, 256)     fused bias (f32); padded logit lanes = -1e30
    out_ref : VMEM (1, B, 128)     log_softmax logits for step t (f32)
    hid_ref : VMEM (B, 128)        hidden state carry (resident across time steps)
    """
    t = pl.program_id(1)

    @pl.when(t == 0)
    def _init():
        hid_ref[...] = h0_ref[...]

    x = x_ref[0]                                   # (B, 128) bf16
    h = hid_ref[...].astype(jnp.bfloat16)          # (B, 128) bf16 (padded lanes are 0)

    res = (jnp.dot(x, wx_ref[0], preferred_element_type=jnp.float32)
           + jnp.dot(h, wh_ref[0], preferred_element_type=jnp.float32)
           + b_ref[0])                             # (B, 256) f32

    # hidden group: lanes [0, 128) (real hidden in lanes [0, HIDDEN_SIZE), rest 0)
    hid_ref[...] = res[:, :PAD]

    # logits group: lanes [128, 256); padded lanes carry -1e30 bias -> exp == 0
    logits = res[:, PAD:]
    m = jnp.max(logits, axis=-1, keepdims=True)
    shifted = logits - m
    lse = jnp.log(jnp.sum(jnp.exp(shifted), axis=-1, keepdims=True))
    out_ref[0] = shifted - lse


@jax.jit
def _rnn_seq_call(lang_id, x_pad, h0_pad, wx, wh, bias):
    T, Bp, _ = x_pad.shape
    nb = Bp // BATCH_BLOCK

    grid_spec = pltpu.PrefetchScalarGridSpec(
        num_scalar_prefetch=1,
        grid=(nb, T),
        in_specs=[
            pl.BlockSpec((1, BATCH_BLOCK, PAD), lambda b, t, lid: (t, b, 0)),      # x
            pl.BlockSpec((BATCH_BLOCK, PAD),    lambda b, t, lid: (b, 0)),         # h0
            pl.BlockSpec((1, PAD, N_TOTAL),     lambda b, t, lid: (lid[0], 0, 0)),  # W_x
            pl.BlockSpec((1, PAD, N_TOTAL),     lambda b, t, lid: (lid[0], 0, 0)),  # W_h
            pl.BlockSpec((1, 1, N_TOTAL),       lambda b, t, lid: (lid[0], 0, 0)),  # bias
        ],
        out_specs=(
            pl.BlockSpec((1, BATCH_BLOCK, PAD), lambda b, t, lid: (t, b, 0)),      # out
            pl.BlockSpec((BATCH_BLOCK, PAD),    lambda b, t, lid: (b, 0)),         # h final
        ),
    )

    return pl.pallas_call(
        rnn_seq_kernel,
        out_shape=(jax.ShapeDtypeStruct((T, Bp, PAD), jnp.float32),
                   jax.ShapeDtypeStruct((Bp, PAD), jnp.float32)),
        grid_spec=grid_spec,
        compiler_params=pltpu.CompilerParams(
            dimension_semantics=("parallel", "arbitrary")),
    )(lang_id, x_pad, h0_pad, wx, wh, bias)


def _pad_inputs(letters, hidden0):
    """letters (T, B, INPUT_SIZE) f32, hidden0 (B, HIDDEN_SIZE) f32 -> padded slabs."""
    T, B, _ = letters.shape
    Bp = ((B + BATCH_BLOCK - 1) // BATCH_BLOCK) * BATCH_BLOCK
    x_pad = jnp.zeros((T, Bp, PAD), jnp.bfloat16)
    x_pad = x_pad.at[:, :B, :INPUT_SIZE].set(letters.astype(jnp.bfloat16))
    h0_pad = jnp.zeros((Bp, PAD), jnp.float32)
    h0_pad = h0_pad.at[:B, :HIDDEN_SIZE].set(hidden0)
    return x_pad, h0_pad


class RNNPallas:
    """Pallas port of the torch RNN module (per-language fused i2h/i2o linears)."""

    def __init__(self, input_size, hidden_size, output_size, key):
        assert input_size == INPUT_SIZE and hidden_size == HIDDEN_SIZE
        assert output_size == OUTPUT_SIZE
        self.hidden_size = hidden_size

        fan_in = input_size + hidden_size
        bound = 1.0 / math.sqrt(fan_in)
        k1, k2, k3, k4 = jax.random.split(key, 4)
        # nn.Linear-style init, stored transposed: (in_features, out_features)
        w_i2h = jax.random.uniform(k1, (NUM_LANG, fan_in, hidden_size),
                                   jnp.float32, -bound, bound)
        w_i2o = jax.random.uniform(k2, (NUM_LANG, fan_in, output_size),
                                   jnp.float32, -bound, bound)
        b_i2h = jax.random.uniform(k3, (NUM_LANG, hidden_size), jnp.float32, -bound, bound)
        b_i2o = jax.random.uniform(k4, (NUM_LANG, output_size), jnp.float32, -bound, bound)

        # Fused, lane-padded layout: columns [0,128) = hidden group, [128,256) = logits.
        wx = jnp.zeros((NUM_LANG, PAD, N_TOTAL), jnp.float32)
        wx = wx.at[:, :input_size, :hidden_size].set(w_i2h[:, :input_size, :])
        wx = wx.at[:, :input_size, PAD:PAD + output_size].set(w_i2o[:, :input_size, :])

        wh = jnp.zeros((NUM_LANG, PAD, N_TOTAL), jnp.float32)
        wh = wh.at[:, :hidden_size, :hidden_size].set(w_i2h[:, input_size:, :])
        wh = wh.at[:, :hidden_size, PAD:PAD + output_size].set(w_i2o[:, input_size:, :])

        bias = jnp.zeros((NUM_LANG, 1, N_TOTAL), jnp.float32)
        bias = bias.at[:, 0, :hidden_size].set(b_i2h)
        bias = bias.at[:, 0, PAD:PAD + output_size].set(b_i2o)
        bias = bias.at[:, 0, PAD + output_size:].set(NEG_INF)   # padded logit lanes

        self.Wx = wx.astype(jnp.bfloat16)     # (18, 128, 256)
        self.Wh = wh.astype(jnp.bfloat16)     # (18, 128, 256)
        self.bias = bias                      # (18, 1, 256) f32

    def init_hidden(self):
        return jnp.zeros((self.hidden_size,), jnp.float32)

    def run_sequence(self, letters, hidden0, language):
        """letters: (T, INPUT_SIZE) or (T, B, INPUT_SIZE); hidden0: (H,) or (B, H)."""
        letters = jnp.asarray(letters, jnp.float32)
        hidden0 = jnp.asarray(hidden0, jnp.float32)
        unbatched = letters.ndim == 2
        if unbatched:
            letters = letters[:, None, :]
        if hidden0.ndim == 1:
            hidden0 = hidden0[None, :]
        T, B, _ = letters.shape

        x_pad, h0_pad = _pad_inputs(letters, hidden0)
        lang_id = jnp.array([LANG_TO_ID[language]], dtype=jnp.int32)
        out_pad, h_pad = _rnn_seq_call(lang_id, x_pad, h0_pad, self.Wx, self.Wh, self.bias)

        out = out_pad[:, :B, :OUTPUT_SIZE]
        h_fin = h_pad[:B, :HIDDEN_SIZE]
        if unbatched:
            out, h_fin = out[:, 0, :], h_fin[0]
        return out, h_fin

    def forward(self, letter_input, hidden_input, language):
        # Single torch-like step (output, hidden), routed through the fused kernel.
        out, hidden = self.run_sequence(
            jnp.asarray(letter_input, jnp.float32)[None, :], hidden_input, language)
        return out[0], hidden

    __call__ = forward

    def predict(self, output):
        idx = jnp.argmax(output, axis=1)
        return ''.join(LETTERS[int(i)] for i in idx)


# ----------------------------------------------------------------------------
# Pure-JAX reference (same padded math / dtypes) for correctness checking.
# ----------------------------------------------------------------------------
def _reference_sequence(x_pad, h0_pad, wx_l, wh_l, bias_l):
    wx32 = wx_l.astype(jnp.float32)
    wh32 = wh_l.astype(jnp.float32)
    h = h0_pad
    outs = []
    for t in range(x_pad.shape[0]):
        res = (x_pad[t].astype(jnp.float32) @ wx32
               + h.astype(jnp.bfloat16).astype(jnp.float32) @ wh32
               + bias_l)
        h = res[:, :PAD]
        outs.append(jax.nn.log_softmax(res[:, PAD:], axis=-1))
    return jnp.stack(outs), h


if __name__ == "__main__":
    key = jax.random.PRNGKey(0)
    kparam, kseq = jax.random.split(key)

    rnn = RNNPallas(INPUT_SIZE, HIDDEN_SIZE, OUTPUT_SIZE, kparam)

    # Small deterministic batch of sequences: T=8 steps, B=8 names.
    T, B = 8, 8
    idx = jax.random.randint(kseq, (T, B), 0, INPUT_SIZE)
    letters = jax.nn.one_hot(idx, INPUT_SIZE, dtype=jnp.float32)     # (T, B, 53)
    h0 = jnp.zeros((B, HIDDEN_SIZE), jnp.float32)

    outs, h_final = rnn.run_sequence(letters, h0, 'English')
    outs = jax.block_until_ready(outs)
    h_final = jax.block_until_ready(h_final)

    assert outs.shape == (T, B, OUTPUT_SIZE)
    assert h_final.shape == (B, HIDDEN_SIZE)
    # log-softmax rows must normalize to 1 over the 53 real classes
    assert bool(jnp.all(jnp.abs(jnp.sum(jnp.exp(outs), axis=-1) - 1.0) < 1e-3))

    # numerical check against the pure-JAX reference on identical padded inputs
    lid = LANG_TO_ID['English']
    x_pad, h0_pad = _pad_inputs(letters, h0)
    ref_out_pad, ref_h_pad = _reference_sequence(
        x_pad, h0_pad, rnn.Wx[lid], rnn.Wh[lid], rnn.bias[lid])
    assert bool(jnp.all(jnp.abs(ref_out_pad[:, :B, :OUTPUT_SIZE] - outs) < 2e-3))
    assert bool(jnp.all(jnp.abs(ref_h_pad[:B, :HIDDEN_SIZE] - h_final) < 2e-3))

    # torch-like single-step API (different language -> same compiled kernel,
    # only the scalar-prefetched language id changes)
    letter0 = jax.nn.one_hot(jnp.array(0), INPUT_SIZE, dtype=jnp.float32)
    out1, h1 = rnn(letter0, rnn.init_hidden(), 'French')
    out1 = jax.block_until_ready(out1)
    assert out1.shape == (OUTPUT_SIZE,) and h1.shape == (HIDDEN_SIZE,)

    _ = rnn.predict(outs[:, 0, :])

    print("KERNEL_OK")
</pallas_src>

<mosaic_0001>
module attributes {stable_mosaic.version = 11 : i64} {
  func.func @rnn_seq_kernel(%arg0: i32, %arg1: i32, %arg2: memref<1xi32, #tpu.memory_space<smem>>, %arg3: memref<1x8x128xbf16, #tpu.memory_space<vmem>>, %arg4: memref<8x128xf32, #tpu.memory_space<vmem>>, %arg5: memref<1x128x256xbf16, #tpu.memory_space<vmem>>, %arg6: memref<1x128x256xbf16, #tpu.memory_space<vmem>>, %arg7: memref<1x1x256xf32, #tpu.memory_space<vmem>>, %arg8: memref<1x8x128xf32, #tpu.memory_space<vmem>>, %arg9: memref<8x128xf32, #tpu.memory_space<vmem>>) attributes {dimension_semantics = [#tpu.dimension_semantics<parallel>, #tpu.dimension_semantics<arbitrary>], iteration_bounds = array<i64: 1, 8>, scalar_prefetch = 1 : i64, scratch_operands = 0 : i64, tpu.core_type = #tpu.core_type<tc>, window_params = [{transform_indices = @transform_0, window_bounds = array<i64: 1, 8, 128>}, {transform_indices = @transform_1, window_bounds = array<i64: 8, 128>}, {transform_indices = @transform_2, window_bounds = array<i64: 1, 128, 256>}, {transform_indices = @transform_3, window_bounds = array<i64: 1, 128, 256>}, {transform_indices = @transform_4, window_bounds = array<i64: 1, 1, 256>}, {transform_indices = @transform_5, window_bounds = array<i64: 1, 8, 128>}, {transform_indices = @transform_6, window_bounds = array<i64: 8, 128>}]} {
    %c0_i32 = arith.constant 0 : i32
    %0 = arith.cmpi eq, %arg1, %c0_i32 : i32
    %1 = arith.extui %0 : i1 to i32
    %c0_i32_0 = arith.constant 0 : i32
    %2 = arith.cmpi ne, %1, %c0_i32_0 : i32
    scf.if %2 {
      %c0_22 = arith.constant 0 : index
      %c0_23 = arith.constant 0 : index
      %34 = vector.load %arg4[%c0_22, %c0_23] : memref<8x128xf32, #tpu.memory_space<vmem>>, vector<8x128xf32>
      %c0_24 = arith.constant 0 : index
      %c0_25 = arith.constant 0 : index
      %35 = vector.load %arg9[%c0_24, %c0_25] : memref<8x128xf32, #tpu.memory_space<vmem>>, vector<8x128xf32>
      tpu.vector_store %arg9[%c0_24, %c0_25], %34 {strides = array<i32>} : memref<8x128xf32, #tpu.memory_space<vmem>>, vector<8x128xf32>,
    } else {
    }
    %c0 = arith.constant 0 : index
    %c0_1 = arith.constant 0 : index
    %c0_2 = arith.constant 0 : index
    %3 = vector.load %arg3[%c0, %c0_1, %c0_2] : memref<1x8x128xbf16, #tpu.memory_space<vmem>>, vector<1x8x128xbf16>
    %4 = vector.shape_cast %3 : vector<1x8x128xbf16> to vector<8x128xbf16>
    %c0_3 = arith.constant 0 : index
    %c0_4 = arith.constant 0 : index
    %5 = vector.load %arg9[%c0_3, %c0_4] : memref<8x128xf32, #tpu.memory_space<vmem>>, vector<8x128xf32>
    %6 = arith.truncf %5 : vector<8x128xf32> to vector<8x128xbf16>
    %c0_5 = arith.constant 0 : index
    %c0_6 = arith.constant 0 : index
    %c0_7 = arith.constant 0 : index
    %7 = vector.load %arg5[%c0_5, %c0_6, %c0_7] : memref<1x128x256xbf16, #tpu.memory_space<vmem>>, vector<1x128x256xbf16>
    %8 = vector.shape_cast %7 : vector<1x128x256xbf16> to vector<128x256xbf16>
    %cst = arith.constant dense<0.000000e+00> : vector<8x256xf32>
    %9 = tpu.matmul %4, %8, %cst {dimension_numbers = #tpu.dot_dimension_numbers<[1], [0], [0], [1], [0, 0, 1, 1], [], []>} : vector<8x128xbf16>, vector<128x256xbf16>, vector<8x256xf32> -> vector<8x256xf32>
    %c0_8 = arith.constant 0 : index
    %c0_9 = arith.constant 0 : index
    %c0_10 = arith.constant 0 : index
    %10 = vector.load %arg6[%c0_8, %c0_9, %c0_10] : memref<1x128x256xbf16, #tpu.memory_space<vmem>>, vector<1x128x256xbf16>
    %11 = vector.shape_cast %10 : vector<1x128x256xbf16> to vector<128x256xbf16>
    %cst_11 = arith.constant dense<0.000000e+00> : vector<8x256xf32>
    %12 = tpu.matmul %6, %11, %cst_11 {dimension_numbers = #tpu.dot_dimension_numbers<[1], [0], [0], [1], [0, 0, 1, 1], [], []>} : vector<8x128xbf16>, vector<128x256xbf16>, vector<8x256xf32> -> vector<8x256xf32>
    %13 = arith.addf %9, %12 : vector<8x256xf32>
    %c0_12 = arith.constant 0 : index
    %c0_13 = arith.constant 0 : index
    %c0_14 = arith.constant 0 : index
    %14 = vector.load %arg7[%c0_12, %c0_13, %c0_14] : memref<1x1x256xf32, #tpu.memory_space<vmem>>, vector<1x1x256xf32>
    %15 = vector.shape_cast %14 : vector<1x1x256xf32> to vector<1x256xf32>
    %16 = vector.broadcast %15 : vector<1x256xf32> to vector<8x256xf32>
    %17 = arith.addf %13, %16 : vector<8x256xf32>
    %18 = vector.extract_strided_slice %17 {offsets = [0, 0], sizes = [8, 128], strides = [1, 1]} : vector<8x256xf32> to vector<8x128xf32>
    %c0_15 = arith.constant 0 : index
    %c0_16 = arith.constant 0 : index
    %19 = vector.load %arg9[%c0_15, %c0_16] : memref<8x128xf32, #tpu.memory_space<vmem>>, vector<8x128xf32>
    tpu.vector_store %arg9[%c0_15, %c0_16], %18 {strides = array<i32>} : memref<8x128xf32, #tpu.memory_space<vmem>>, vector<8x128xf32>,
    %20 = vector.extract_strided_slice %17 {offsets = [0, 128], sizes = [8, 128], strides = [1, 1]} : vector<8x256xf32> to vector<8x128xf32>
    %cst_17 = arith.constant dense<0xFF800000> : vector<8xf32>
    %21 = vector.multi_reduction <maximumf>, %20, %cst_17 [1] : vector<8x128xf32> to vector<8xf32>
    %22 = vector.shape_cast %21 : vector<8xf32> to vector<8x1xf32>
    %23 = vector.broadcast %22 : vector<8x1xf32> to vector<8x128xf32>
    %24 = arith.subf %20, %23 : vector<8x128xf32>
    %25 = math.exp %24 : vector<8x128xf32>
    %cst_18 = arith.constant dense<0.000000e+00> : vector<8xf32>
    %26 = vector.multi_reduction <add>, %25, %cst_18 [1] : vector<8x128xf32> to vector<8xf32>
    %27 = vector.shape_cast %26 : vector<8xf32> to vector<8x1xf32>
    %28 = math.log %27 : vector<8x1xf32>
    %29 = vector.broadcast %28 : vector<8x1xf32> to vector<8x128xf32>
    %30 = arith.subf %24, %29 : vector<8x128xf32>
    %c0_19 = arith.constant 0 : index
    %c0_20 = arith.constant 0 : index
    %c0_21 = arith.constant 0 : index
    %31 = vector.load %arg8[%c0_19, %c0_20, %c0_21] : memref<1x8x128xf32, #tpu.memory_space<vmem>>, vector<1x8x128xf32>
    %32 = vector.shape_cast %31 : vector<1x8x128xf32> to vector<8x128xf32>
    %33 = vector.shape_cast %30 : vector<8x128xf32> to vector<1x8x128xf32>
    tpu.vector_store %arg8[%c0_19, %c0_20, %c0_21], %33 {strides = array<i32>} : memref<1x8x128xf32, #tpu.memory_space<vmem>>, vector<1x8x128xf32>,
    return
  }
  func.func @transform_0(%arg0: i32, %arg1: i32, %arg2: memref<1xi32, #tpu.memory_space<smem>>) -> (i32, i32, i32) {
    %c0_i32 = arith.constant 0 : i32
    %c0_i32_0 = arith.constant 0 : i32
    return %arg1, %arg0, %c0_i32 : i32, i32, i32
  }
  func.func @transform_1(%arg0: i32, %arg1: i32, %arg2: memref<1xi32, #tpu.memory_space<smem>>) -> (i32, i32) {
    %c0_i32 = arith.constant 0 : i32
    %c0_i32_0 = arith.constant 0 : i32
    return %arg0, %c0_i32 : i32, i32
  }
  func.func @transform_2(%arg0: i32, %arg1: i32, %arg2: memref<1xi32, #tpu.memory_space<smem>>) -> (i32, i32, i32) {
    %c0 = arith.constant 0 : index
    %0 = memref.load %arg2[%c0] : memref<1xi32, #tpu.memory_space<smem>>
    %c0_i32 = arith.constant 0 : i32
    %c0_i32_0 = arith.constant 0 : i32
    %c0_i32_1 = arith.constant 0 : i32
    return %0, %c0_i32, %c0_i32_0 : i32, i32, i32
  }
  func.func @transform_3(%arg0: i32, %arg1: i32, %arg2: memref<1xi32, #tpu.memory_space<smem>>) -> (i32, i32, i32) {
    %c0 = arith.constant 0 : index
    %0 = memref.load %arg2[%c0] : memref<1xi32, #tpu.memory_space<smem>>
    %c0_i32 = arith.constant 0 : i32
    %c0_i32_0 = arith.constant 0 : i32
    %c0_i32_1 = arith.constant 0 : i32
    return %0, %c0_i32, %c0_i32_0 : i32, i32, i32
  }
  func.func @transform_4(%arg0: i32, %arg1: i32, %arg2: memref<1xi32, #tpu.memory_space<smem>>) -> (i32, i32, i32) {
    %c0 = arith.constant 0 : index
    %0 = memref.load %arg2[%c0] : memref<1xi32, #tpu.memory_space<smem>>
    %c0_i32 = arith.constant 0 : i32
    %c0_i32_0 = arith.constant 0 : i32
    %c0_i32_1 = arith.constant 0 : i32
    return %0, %c0_i32, %c0_i32_0 : i32, i32, i32
  }
  func.func @transform_5(%arg0: i32, %arg1: i32, %arg2: memref<1xi32, #tpu.memory_space<smem>>) -> (i32, i32, i32) {
    %c0_i32 = arith.constant 0 : i32
    %c0_i32_0 = arith.constant 0 : i32
    return %arg1, %arg0, %c0_i32 : i32, i32, i32
  }
  func.func @transform_6(%arg0: i32, %arg1: i32, %arg2: memref<1xi32, #tpu.memory_space<smem>>) -> (i32, i32) {
    %c0_i32 = arith.constant 0 : i32
    %c0_i32_0 = arith.constant 0 : i32
    return %arg0, %c0_i32 : i32, i32
  }
}

</mosaic_0001>

<llo_original>
// kernel: _rnn_seq_call.1
$region0: #{_rnn_seq_call.1}
  #allocation0 [shape = 'u32[]', space=smem, size = 0x4, offset = 0x4, fixed_abs, tag = 'smem constant byte address 0x4 - core index']
  #allocation1 [shape = 'u32[144,128]{1,0:T(1,128)}', space=vmem, size = 0x12000, scoped, tag = 'internal scratch']
  #allocation2 [shape = 's32[1]{0}', space=sflag, size = 0x4, scoped, tag = 'scoped memory for _rnn_seq_call.1']
  #allocation3 [shape = 's32[1]{0:T(128)S(6)}', space=smem, size = 0x200, scoped, tag = 'prefetched SMEM operand 0']
  %s0 = inlined_call_operand.<no memory space> [shape: s32[1], index: 0, kind: input, shape index: {}]
  %s1 = inlined_call_operand.hbm [shape: bf16[8,8,128], index: 1, kind: input, shape index: {}]
  %s2 = inlined_call_operand.hbm [shape: f32[8,128], index: 2, kind: input, shape index: {}]
  %s3 = inlined_call_operand.hbm [shape: bf16[18,128,256], index: 3, kind: input, shape index: {}]
  %s4 = inlined_call_operand.hbm [shape: bf16[18,128,256], index: 4, kind: input, shape index: {}]
  %s5 = inlined_call_operand.hbm [shape: f32[18,1,256], index: 5, kind: input, shape index: {}]
  %s6 = inlined_call_operand.hbm [shape: f32[8,8,128], index: 6, kind: output, shape index: {0}]
  %s7 = inlined_call_operand.hbm [shape: f32[8,128], index: 7, kind: output, shape index: {1}]
  %8 = xla_tuple %s6, %s7
  %s9 = sld [smem:[#allocation0]]
  $region85: #{_rnn_seq_call.1} parent=0
    _
  %s11 = ssub.s32 1, %s9
  %s12 = scalar_select 0, %s11, %s9
  %13 = sst [smem:[#allocation3]] %s0
  $region1: #{_rnn_seq_call.1} parent=0
    #allocation4 [shape = 'u8[4096]{0}', space=vmem, size = 0x1000, scoped, tag = 'input window, operand 1']
    #allocation5 [shape = 's32[2]{0}', space=sflag, size = 0x8, scoped, tag = 'scoped memory for _rnn_seq_call.1']
    #allocation6 [shape = 's32[2]{0}', space=sflag, size = 0x8, scoped, tag = 'scoped memory for _rnn_seq_call.1']
    #allocation7 [shape = 'u8[4096]{0}', space=vmem, size = 0x1000, scoped, tag = 'input window, operand 2, single buffered']
    #allocation8 [shape = 's32[1]{0}', space=sflag, size = 0x4, scoped, tag = 'scoped memory for _rnn_seq_call.1']
    #allocation9 [shape = 'u8[65536]{0}', space=vmem, size = 0x10000, scoped, tag = 'input window, operand 3, single buffered']
    #allocation10 [shape = 'u8[65536]{0}', space=vmem, size = 0x10000, scoped, tag = 'input window, operand 4, single buffered']
    #allocation11 [shape = 's32[1]{0}', space=sflag, size = 0x4, scoped, tag = 'scoped memory for _rnn_seq_call.1']
    #allocation12 [shape = 'u8[1024]{0}', space=vmem, size = 0x400, scoped, tag = 'input window, operand 5, single buffered']
    #allocation13 [shape = 'u8[8192]{0}', space=vmem, size = 0x2000, scoped, tag = 'output window, operand 0']
    #allocation14 [shape = 'u8[4096]{0}', space=vmem, size = 0x1000, scoped, tag = 'output window, operand 1, single buffered']
    #allocation15 [shape = 's32[1]{0}', space=sflag, size = 0x4, scoped, tag = 'scoped memory for _rnn_seq_call.1']
    %14 = vsyncpa [#allocation5], 0
    %s15 = scalar_lea.sflag [#allocation5], 1
    %16 = vsyncpa %s15, 0
    %17 = vsyncpa [#allocation8], 0
    %18 = vsyncpa [#allocation11], 0
    %19 = vsyncpa [#allocation6], 0
    %s20 = scalar_lea.sflag [#allocation6], 1
    %21 = vsyncpa %s20, 0
    %22 = vsyncpa [#allocation15], 0
    loop: start=0, step=1, limit=10
    $region2: #{_rnn_seq_call.1} parent=1 // loop_pre_header
      _
    $region3: #{_rnn_seq_call.1} parent=1 // loop_header
      %s24 = sphi 0, %s28
      %p25 = scmp.ge.s32.totalorder %s24, 10
      %s31 = sphi 0, %s43
      %s32 = sphi 0, %s39
      %s33 = sphi 0, %s31
      %s34 = sphi 0, %s32
      %s35 = sphi 0, %s33
      %s36 = sphi 0, %s34
      %s48 = sphi 0, %s50
      %s51 = sphi 0, %s48
      %s52 = sphi 0, %s51
      %s68 = sphi 0, %s52
      %s74 = sphi 0, %s76
      %s77 = sphi 0, %s74
      %s78 = sphi 0, %s77
      %s94 = sphi 0, %s78
      %s102 = sphi 0, %s104
      %s105 = sphi 0, %s102
      %s106 = sphi 0, %s105
      %s122 = sphi 0, %s106
      %s130 = sphi 0, %s132
      %s133 = sphi 0, %s130
      %s134 = sphi 0, %s133
      %s150 = sphi 0, %s134
      %s158 = sphi 0, %s160
      %s161 = sphi 0, %s158
      %s162 = sphi 0, %s161
      %s178 = sphi 0, %s162
      %s186 = sphi 0, %s188
      %s189 = sphi 0, %s186
      %s190 = sphi 0, %s189
      %s206 = sphi 0, %s190
      %s212 = sphi 0, %s214
      %s215 = sphi 0, %s212
      %s216 = sphi 0, %s215
      %s232 = sphi 0, %s216
    $region4: #{_rnn_seq_call.1} parent=1 // loop_header_branch
      %27 = sbr.rel (%p25) target = $region8
    $region5: #{_rnn_seq_call.1} parent=1 // loop_body
      %s29 = ssub.s32 %s24, 1
      %s30 = ssub.s32 %s24, 2
      %s37 = sadd.s32 1, %s32
      %p38 = scmp.ge.s32.totalorder %s37, 8
      %s39 = scalar_select %p38, 0, %s37
      %s40 = sadd.s32 1, %s31
      %s41 = scalar_select %p38, %s40, %s31
      %p42 = scmp.ge.s32.totalorder %s41, 1
      %s43 = scalar_select %p42, 0, %s41
      %s44 = ssub.s32 %s32, %s39
      %s45 = ssub.s32 %s31, %s43
      %s46 = sor.u32 %s44, %s45
      %p47 = scmp.eq.s32.totalorder %s46, 0
      %s49 = sadd.s32 %s48, 1
      %s50 = scalar_select %p47, %s48, %s49
      %p53 = pneg %p47
      %p54 = scmp.eq.s32.totalorder %s24, 7
      %p55 = por %p53, %p54
      %p56 = scmp.ne.s32.totalorder %s48, %s51
      %p57 = scmp.eq.s32.totalorder %s24, 0
      %p58 = por %p56, %p57
      %p59 = scmp.ne.s32.totalorder %s48, %s51
      %p60 = scmp.eq.s32.totalorder %s29, 7
      %p61 = por %p59, %p60
      %p62 = scmp.ne.s32.totalorder %s51, %s52
      %p63 = scmp.eq.s32.totalorder %s29, 0
      %p64 = por %p62, %p63
      %p65 = scmp.ne.s32.totalorder %s51, %s52
      %p66 = scmp.eq.s32.totalorder %s30, 7
      %p67 = por %p65, %p66
      %p69 = scmp.ne.s32.totalorder %s52, %s68
      %p70 = scmp.eq.s32.totalorder %s30, 0
      %p71 = por %p69, %p70
      %s72 = ssub.s32 %s31, %s43
      %p73 = scmp.eq.s32.totalorder %s72, 0
      %s75 = sadd.s32 %s74, 1
      %s76 = scalar_select %p73, %s74, %s75
      %p79 = pneg %p73
      %p80 = scmp.eq.s32.totalorder %s24, 7
      %p81 = por %p79, %p80
      %p82 = scmp.ne.s32.totalorder %s74, %s77
      %p83 = scmp.eq.s32.totalorder %s24, 0
      %p84 = por %p82, %p83
      %p85 = scmp.ne.s32.totalorder %s74, %s77
      %p86 = scmp.eq.s32.totalorder %s29, 7
      %p87 = por %p85, %p86
      %p88 = scmp.ne.s32.totalorder %s77, %s78
      %p89 = scmp.eq.s32.totalorder %s29, 0
      %p90 = por %p88, %p89
      %p91 = scmp.ne.s32.totalorder %s77, %s78
      %p92 = scmp.eq.s32.totalorder %s30, 7
      %p93 = por %p91, %p92
      %p95 = scmp.ne.s32.totalorder %s78, %s94
      %p96 = scmp.eq.s32.totalorder %s30, 0
      %p97 = por %p95, %p96
      %s98 = sld [smem:[#allocation3]]
      %s99 = sld [smem:[#allocation3]]
      %s100 = ssub.s32 %s98, %s99
      %p101 = scmp.eq.s32.totalorder %s100, 0
      %s103 = sadd.s32 %s102, 1
      %s104 = scalar_select %p101, %s102, %s103
      %p107 = pneg %p101
      %p108 = scmp.eq.s32.totalorder %s24, 7
      %p109 = por %p107, %p108
      %p110 = scmp.ne.s32.totalorder %s102, %s105
      %p111 = scmp.eq.s32.totalorder %s24, 0
      %p112 = por %p110, %p111
      %p113 = scmp.ne.s32.totalorder %s102, %s105
      %p114 = scmp.eq.s32.totalorder %s29, 7
      %p115 = por %p113, %p114
      %p116 = scmp.ne.s32.totalorder %s105, %s106
      %p117 = scmp.eq.s32.totalorder %s29, 0
      %p118 = por %p116, %p117
      %p119 = scmp.ne.s32.totalorder %s105, %s106
      %p120 = scmp.eq.s32.totalorder %s30, 7
      %p121 = por %p119, %p120
      %p123 = scmp.ne.s32.totalorder %s106, %s122
      %p124 = scmp.eq.s32.totalorder %s30, 0
      %p125 = por %p123, %p124
      %s126 = sld [smem:[#allocation3]]
      %s127 = sld [smem:[#allocation3]]
      %s128 = ssub.s32 %s126, %s127
      %p129 = scmp.eq.s32.totalorder %s128, 0
      %s131 = sadd.s32 %s130, 1
      %s132 = scalar_select %p129, %s130, %s131
      %p135 = pneg %p129
      %p136 = scmp.eq.s32.totalorder %s24, 7
      %p137 = por %p135, %p136
      %p138 = scmp.ne.s32.totalorder %s130, %s133
      %p139 = scmp.eq.s32.totalorder %s24, 0
      %p140 = por %p138, %p139
      %p141 = scmp.ne.s32.totalorder %s130, %s133
      %p142 = scmp.eq.s32.totalorder %s29, 7
      %p143 = por %p141, %p142
      %p144 = scmp.ne.s32.totalorder %s133, %s134
      %p145 = scmp.eq.s32.totalorder %s29, 0
      %p146 = por %p144, %p145
      %p147 = scmp.ne.s32.totalorder %s133, %s134
      %p148 = scmp.eq.s32.totalorder %s30, 7
      %p149 = por %p147, %p148
      %p151 = scmp.ne.s32.totalorder %s134, %s150
      %p152 = scmp.eq.s32.totalorder %s30, 0
      %p153 = por %p151, %p152
      %s154 = sld [smem:[#allocation3]]
      %s155 = sld [smem:[#allocation3]]
      %s156 = ssub.s32 %s154, %s155
      %p157 = scmp.eq.s32.totalorder %s156, 0
      %s159 = sadd.s32 %s158, 1
      %s160 = scalar_select %p157, %s158, %s159
      %p163 = pneg %p157
      %p164 = scmp.eq.s32.totalorder %s24, 7
      %p165 = por %p163, %p164
      %p166 = scmp.ne.s32.totalorder %s158, %s161
      %p167 = scmp.eq.s32.totalorder %s24, 0
      %p168 = por %p166, %p167
      %p169 = scmp.ne.s32.totalorder %s158, %s161
      %p170 = scmp.eq.s32.totalorder %s29, 7
      %p171 = por %p169, %p170
      %p172 = scmp.ne.s32.totalorder %s161, %s162
      %p173 = scmp.eq.s32.totalorder %s29, 0
      %p174 = por %p172, %p173
      %p175 = scmp.ne.s32.totalorder %s161, %s162
      %p176 = scmp.eq.s32.totalorder %s30, 7
      %p177 = por %p175, %p176
      %p179 = scmp.ne.s32.totalorder %s162, %s178
      %p180 = scmp.eq.s32.totalorder %s30, 0
      %p181 = por %p179, %p180
      %s182 = ssub.s32 %s32, %s39
      %s183 = ssub.s32 %s31, %s43
      %s184 = sor.u32 %s182, %s183
      %p185 = scmp.eq.s32.totalorder %s184, 0
      %s187 = sadd.s32 %s186, 1
      %s188 = scalar_select %p185, %s186, %s187
      %p191 = pneg %p185
      %p192 = scmp.eq.s32.totalorder %s24, 7
      %p193 = por %p191, %p192
      %p194 = scmp.ne.s32.totalorder %s186, %s189
      %p195 = scmp.eq.s32.totalorder %s24, 0
      %p196 = por %p194, %p195
      %p197 = scmp.ne.s32.totalorder %s186, %s189
      %p198 = scmp.eq.s32.totalorder %s29, 7
      %p199 = por %p197, %p198
      %p200 = scmp.ne.s32.totalorder %s189, %s190
      %p201 = scmp.eq.s32.totalorder %s29, 0
      %p202 = por %p200, %p201
      %p203 = scmp.ne.s32.totalorder %s189, %s190
      %p204 = scmp.eq.s32.totalorder %s30, 7
      %p205 = por %p203, %p204
      %p207 = scmp.ne.s32.totalorder %s190, %s206
      %p208 = scmp.eq.s32.totalorder %s30, 0
      %p209 = por %p207, %p208
      %s210 = ssub.s32 %s31, %s43
      %p211 = scmp.eq.s32.totalorder %s210, 0
      %s213 = sadd.s32 %s212, 1
      %s214 = scalar_select %p211, %s212, %s213
      %p217 = pneg %p211
      %p218 = scmp.eq.s32.totalorder %s24, 7
      %p219 = por %p217, %p218
      %p220 = scmp.ne.s32.totalorder %s212, %s215
      %p221 = scmp.eq.s32.totalorder %s24, 0
      %p222 = por %p220, %p221
      %p223 = scmp.ne.s32.totalorder %s212, %s215
      %p224 = scmp.eq.s32.totalorder %s29, 7
      %p225 = por %p223, %p224
      %p226 = scmp.ne.s32.totalorder %s215, %s216
      %p227 = scmp.eq.s32.totalorder %s29, 0
      %p228 = por %p226, %p227
      %p229 = scmp.ne.s32.totalorder %s215, %s216
      %p230 = scmp.eq.s32.totalorder %s30, 7
      %p231 = por %p229, %p230
      %p233 = scmp.ne.s32.totalorder %s216, %s232
      %p234 = scmp.eq.s32.totalorder %s30, 0
      %p235 = por %p233, %p234
      %p236 = scmp.le.s32.totalorder 1, %s24
      %p237 = scmp.lt.s32.totalorder %s24, 9
      %p238 = pnand %p236, %p237
      %p239 = pneg %p238
      // Predicated region
      $region9: #{_rnn_seq_call.1} parent=5 // pred_check
        _
      $region10: #{_rnn_seq_call.1} parent=5 // pred_check_branch
        %241 = sbr.rel (%p238) target = $region12
      $region11: #{_rnn_seq_call.1} parent=5 // pred_region
        %s242 = ssub.s32 %s24, 1
        // Predicated region
        $region13: #{_rnn_seq_call.1} parent=11 // pred_check
          %p243 = pneg %p90
        $region14: #{_rnn_seq_call.1} parent=11 // pred_check_branch
          %245 = sbr.rel (%p243) target = $region16
        $region15: #{_rnn_seq_call.1} parent=11 // pred_region
          %s247 = ssub.s32 128, 128
          %248 = vsyncadd [#allocation8], %s247
          %s249 = smul.addr %s33, 128
          %s250 = scalar_lea.hbm %s2, %s249
          %s252 = sshll.u32 [#allocation7], 4
          %s253 = int_to_ptr.vmem [resolvable:$true] %s252
          %255 = dma.hbm_to_vmem [thread:$0]  %s250, 128, %s253, [#allocation8]
        $region16: #{_rnn_seq_call.1} parent=11 // pred_fallthru
          _
        // Predicated region
        $region17: #{_rnn_seq_call.1} parent=11 // pred_check
          %p256 = pneg %p118
        $region18: #{_rnn_seq_call.1} parent=11 // pred_check_branch
          %258 = sbr.rel (%p256) target = $region20
        $region19: #{_rnn_seq_call.1} parent=11 // pred_region
          %s259 = sld [smem:[#allocation3]]
          %s261 = ssub.s32 2048, 2048
          %262 = vsyncadd [#allocation8], %s261
          %s263 = smul.addr %s259, 32
          %s264 = smul.addr %s263, 64
          %s265 = scalar_lea.hbm %s3, %s264
          %s266 = sshll.u32 [#allocation9], 4
          %s267 = int_to_ptr.vmem [resolvable:$true] %s266
          %272 = dma.hbm_to_vmem [thread:$0]  %s265, 2048, %s267, [#allocation8], 128, 128, 8
        $region20: #{_rnn_seq_call.1} parent=11 // pred_fallthru
          _
        // Predicated region
        $region21: #{_rnn_seq_call.1} parent=11 // pred_check
          %p273 = pneg %p146
        $region22: #{_rnn_seq_call.1} parent=11 // pred_check_branch
          %275 = sbr.rel (%p273) target = $region24
        $region23: #{_rnn_seq_call.1} parent=11 // pred_region
          %s276 = sld [smem:[#allocation3]]
          %s278 = ssub.s32 2048, 2048
          %279 = vsyncadd [#allocation11], %s278
          %s280 = smul.addr %s276, 32
          %s281 = smul.addr %s280, 64
          %s282 = scalar_lea.hbm %s4, %s281
          %s283 = sshll.u32 [#allocation10], 4
          %s284 = int_to_ptr.vmem [resolvable:$true] %s283
          %289 = dma.hbm_to_vmem [thread:$0]  %s282, 2048, %s284, [#allocation11], 128, 128, 8
        $region24: #{_rnn_seq_call.1} parent=11 // pred_fallthru
          _
        // Predicated region
        $region25: #{_rnn_seq_call.1} parent=11 // pred_check
          %p290 = pneg %p174
        $region26: #{_rnn_seq_call.1} parent=11 // pred_check_branch
          %292 = sbr.rel (%p290) target = $region28
        $region27: #{_rnn_seq_call.1} parent=11 // pred_region
          %s293 = sld [smem:[#allocation3]]
          %s295 = ssub.s32 32, 32
          %296 = vsyncadd [#allocation11], %s295
          %s297 = smul.addr %s293, 2
          %s298 = smul.addr %s297, 16
          %s299 = scalar_lea.hbm %s5, %s298
          %s301 = sshll.u32 [#allocation12], 4
          %s302 = int_to_ptr.vmem [resolvable:$true] %s301
          %304 = dma.hbm_to_vmem [thread:$0]  %s299, 32, %s302, [#allocation11]
        $region28: #{_rnn_seq_call.1} parent=11 // pred_fallthru
          _
      $region12: #{_rnn_seq_call.1} parent=5 // pred_fallthru
        _
      %p305 = scmp.lt.s32.totalorder %s24, 8
      // Predicated region
      $region29: #{_rnn_seq_call.1} parent=5 // pred_check
        %p306 = pneg %p305
      $region30: #{_rnn_seq_call.1} parent=5 // pred_check_branch
        %308 = sbr.rel (%p306) target = $region32
      $region31: #{_rnn_seq_call.1} parent=5 // pred_region
        // Predicated region
        $region33: #{_rnn_seq_call.1} parent=31 // pred_check
          %p309 = pneg %p58
        $region34: #{_rnn_seq_call.1} parent=31 // pred_check_branch
          %311 = sbr.rel (%p309) target = $region36
        $region35: #{_rnn_seq_call.1} parent=31 // pred_region
          %s312 = sand.u32 %s48, 1
          %s313 = scalar_lea.sflag [#allocation5], %s312
          %s314 = sand.u32 %s48, 1
          %s315 = smul.addr %s314, 4
          %s316 = scalar_lea.vmem [#allocation4], %s315
          %s318 = ssub.s32 64, 64
          %319 = vsyncadd %s313, %s318
          %s320 = sadd.s32 %s31, %s32
          %s321 = smul.addr %s320, 64
          %s322 = scalar_lea.hbm %s1, %s321
          %s324 = sshll.u32 %s316, 4
          %s325 = int_to_ptr.vmem [resolvable:$true] %s324
          %327 = dma.hbm_to_vmem [thread:$0]  %s322, 64, %s325, %s313
        $region36: #{_rnn_seq_call.1} parent=31 // pred_fallthru
          _
      $region32: #{_rnn_seq_call.1} parent=5 // pred_fallthru
        _
      %p328 = scmp.le.s32.totalorder 1, %s24
      %p329 = scmp.lt.s32.totalorder %s24, 9
      %p330 = pnand %p328, %p329
      %p331 = pneg %p330
      // Predicated region
      $region37: #{_rnn_seq_call.1} parent=5 // pred_check
        _
      $region38: #{_rnn_seq_call.1} parent=5 // pred_check_branch
        %333 = sbr.rel (%p330) target = $region40
      $region39: #{_rnn_seq_call.1} parent=5 // pred_region
        %s334 = ssub.s32 %s24, 1
        %s335 = sand.u32 %s51, 1
        %s336 = scalar_lea.sflag [#allocation5], %s335
        %s337 = sand.u32 %s51, 1
        %s338 = smul.addr %s337, 4
        %s339 = scalar_lea.vmem [#allocation4], %s338
        // Predicated region
        $region41: #{_rnn_seq_call.1} parent=39 // pred_check
          %p340 = pneg %p64
        $region42: #{_rnn_seq_call.1} parent=39 // pred_check_branch
          %342 = sbr.rel (%p340) target = $region44
        $region43: #{_rnn_seq_call.1} parent=39 // pred_region
          %343 = dma.done %s336, 64
        $region44: #{_rnn_seq_call.1} parent=39 // pred_fallthru
          _
        // Predicated region
        $region45: #{_rnn_seq_call.1} parent=39 // pred_check
          %p344 = pneg %p90
        $region46: #{_rnn_seq_call.1} parent=39 // pred_check_branch
          %346 = sbr.rel (%p344) target = $region48
        $region47: #{_rnn_seq_call.1} parent=39 // pred_region
          %347 = dma.done [#allocation8], 128
        $region48: #{_rnn_seq_call.1} parent=39 // pred_fallthru
          _
        // Predicated region
        $region49: #{_rnn_seq_call.1} parent=39 // pred_check
          %p348 = pneg %p118
        $region50: #{_rnn_seq_call.1} parent=39 // pred_check_branch
          %350 = sbr.rel (%p348) target = $region52
        $region51: #{_rnn_seq_call.1} parent=39 // pred_region
          %351 = dma.done [#allocation8], 2048
        $region52: #{_rnn_seq_call.1} parent=39 // pred_fallthru
          _
        // Predicated region
        $region53: #{_rnn_seq_call.1} parent=39 // pred_check
          %p352 = pneg %p146
        $region54: #{_rnn_seq_call.1} parent=39 // pred_check_branch
          %354 = sbr.rel (%p352) target = $region56
        $region55: #{_rnn_seq_call.1} parent=39 // pred_region
          %355 = dma.done [#allocation11], 2048
        $region56: #{_rnn_seq_call.1} parent=39 // pred_fallthru
          _
        // Predicated region
        $region57: #{_rnn_seq_call.1} parent=39 // pred_check
          %p356 = pneg %p174
        $region58: #{_rnn_seq_call.1} parent=39 // pred_check_branch
          %358 = sbr.rel (%p356) target = $region60
        $region59: #{_rnn_seq_call.1} parent=39 // pred_region
          %359 = dma.done [#allocation11], 32
        $region60: #{_rnn_seq_call.1} parent=39 // pred_fallthru
          _
        %s360 = sand.u32 %s51, 1
        %s361 = scalar_lea.sflag [#allocation5], %s360
        %s362 = sand.u32 %s51, 1
        %s363 = smul.addr %s362, 4
        %s364 = scalar_lea.vmem [#allocation4], %s363
        %p365 = pneg %p64
        %p366 = pneg %p61
        %p367 = pneg %p90
        %p368 = pneg %p87
        %p369 = pneg %p118
        %p370 = pneg %p115
        %p371 = pneg %p146
        %p372 = pneg %p143
        %p373 = pneg %p174
        %p374 = pneg %p171
        %p375 = pneg %p202
        %p376 = pneg %p199
        %s377 = sand.u32 %s189, 1
        %s378 = scalar_lea.sflag [#allocation6], %s377
        %s379 = sand.u32 %s189, 1
        %s380 = smul.addr %s379, 8
        %s381 = scalar_lea.vmem [#allocation13], %s380
        %p382 = pneg %p228
        %p383 = pneg %p225
        %s384 = sld [smem:[#allocation3]]
        %s385 = sld [smem:[#allocation3]]
        %s386 = sld [smem:[#allocation3]]
        %p388 = scmp.eq.s32.totalorder %s34, 0
        // Predicated region
        $region61: #{_rnn_seq_call.1} parent=39 // pred_check
          %p389 = pneg %p388
        $region62: #{_rnn_seq_call.1} parent=39 // pred_check_branch
          %391 = sbr.rel (%p389) target = $region64
        $region63: #{_rnn_seq_call.1} parent=39 // pred_region
          %v392 = vld [vmem:[#allocation7] sm:$0xff]
          %393 = vst [vmem:[#allocation14] sm:$0xff] %v392
        $region64: #{_rnn_seq_call.1} parent=39 // pred_fallthru
          _
        %v394 = vld [vmem:[%s339] sm:$0xf]
        %v395 = vld [vmem:[#allocation14] sm:$0xff]
        %v396 = vpack.c.bf16 %v395, %v395
        %v397 = vld [vmem:[#allocation9] sm:$0xff]
        %v398 = vld [vmem:[#allocation9 + $0x8] sm:$0xff]
        %v399 = vld [vmem:[#allocation9 + $0x10] sm:$0xff]
        %v400 = vld [vmem:[#allocation9 + $0x18] sm:$0xff]
        %v401 = vld [vmem:[#allocation9 + $0x20] sm:$0xff]
        %v402 = vld [vmem:[#allocation9 + $0x28] sm:$0xff]
        %v403 = vld [vmem:[#allocation9 + $0x30] sm:$0xff]
        %v404 = vld [vmem:[#allocation9 + $0x38] sm:$0xff]
        %v405 = vld [vmem:[#allocation9 + $0x40] sm:$0xff]
        %v406 = vld [vmem:[#allocation9 + $0x48] sm:$0xff]
        %v407 = vld [vmem:[#allocation9 + $0x50] sm:$0xff]
        %v408 = vld [vmem:[#allocation9 + $0x58] sm:$0xff]
        %v409 = vld [vmem:[#allocation9 + $0x60] sm:$0xff]
        %v410 = vld [vmem:[#allocation9 + $0x68] sm:$0xff]
        %v411 = vld [vmem:[#allocation9 + $0x70] sm:$0xff]
        %v412 = vld [vmem:[#allocation9 + $0x78] sm:$0xff]
        %v413 = vld [vmem:[#allocation10] sm:$0xff]
        %v414 = vld [vmem:[#allocation10 + $0x8] sm:$0xff]
        %v415 = vld [vmem:[#allocation10 + $0x10] sm:$0xff]
        %v416 = vld [vmem:[#allocation10 + $0x18] sm:$0xff]
        %v417 = vld [vmem:[#allocation10 + $0x20] sm:$0xff]
        %v418 = vld [vmem:[#allocation10 + $0x28] sm:$0xff]
        %v419 = vld [vmem:[#allocation10 + $0x30] sm:$0xff]
        %v420 = vld [vmem:[#allocation10 + $0x38] sm:$0xff]
        %v421 = vld [vmem:[#allocation10 + $0x40] sm:$0xff]
        %v422 = vld [vmem:[#allocation10 + $0x48] sm:$0xff]
        %v423 = vld [vmem:[#allocation10 + $0x50] sm:$0xff]
        %v424 = vld [vmem:[#allocation10 + $0x58] sm:$0xff]
        %v425 = vld [vmem:[#allocation10 + $0x60] sm:$0xff]
        %v426 = vld [vmem:[#allocation10 + $0x68] sm:$0xff]
        %v427 = vld [vmem:[#allocation10 + $0x70] sm:$0xff]
        %v428 = vld [vmem:[#allocation10 + $0x78] sm:$0xff]
        %v445 = vunpack.c.l.b16 %v413
        %v446 = vunpack.c.h.b16 %v413
        %v447 = vunpack.c.l.b16 %v414
        %v448 = vunpack.c.h.b16 %v414
        %v449 = vunpack.c.l.b16 %v415
        %v450 = vunpack.c.h.b16 %v415
        %v451 = vunpack.c.l.b16 %v416
        %v452 = vunpack.c.h.b16 %v416
        %v453 = vunpack.c.l.b16 %v417
        %v454 = vunpack.c.h.b16 %v417
        %v455 = vunpack.c.l.b16 %v418
        %v456 = vunpack.c.h.b16 %v418
        %v457 = vunpack.c.l.b16 %v419
        %v458 = vunpack.c.h.b16 %v419
        %v459 = vunpack.c.l.b16 %v420
        %v460 = vunpack.c.h.b16 %v420
        %v461 = vunpack.c.l.b16 %v421
        %v462 = vunpack.c.h.b16 %v421
        %v463 = vunpack.c.l.b16 %v422
        %v464 = vunpack.c.h.b16 %v422
        %v465 = vunpack.c.l.b16 %v423
        %v466 = vunpack.c.h.b16 %v423
        %v467 = vunpack.c.l.b16 %v424
        %v468 = vunpack.c.h.b16 %v424
        %v469 = vunpack.c.l.b16 %v425
        %v470 = vunpack.c.h.b16 %v425
        %v471 = vunpack.c.l.b16 %v426
        %v472 = vunpack.c.h.b16 %v426
        %v473 = vunpack.c.l.b16 %v427
        %v474 = vunpack.c.h.b16 %v427
        %v475 = vunpack.c.l.b16 %v428
        %v476 = vunpack.c.h.b16 %v428
        %v477 = vpack.c.b16 %v447, %v445
        %v478 = vpack.c.b16 %v448, %v446
        %v479 = vpack.c.b16 %v451, %v449
        %v480 = vpack.c.b16 %v452, %v450
        %v481 = vpack.c.b16 %v455, %v453
        %v482 = vpack.c.b16 %v456, %v454
        %v483 = vpack.c.b16 %v459, %v457
        %v484 = vpack.c.b16 %v460, %v458
        %v485 = vpack.c.b16 %v463, %v461
        %v486 = vpack.c.b16 %v464, %v462
        %v487 = vpack.c.b16 %v467, %v465
        %v488 = vpack.c.b16 %v468, %v466
        %v489 = vpack.c.b16 %v471, %v469
        %v490 = vpack.c.b16 %v472, %v470
        %v491 = vpack.c.b16 %v475, %v473
        %v492 = vpack.c.b16 %v476, %v474
        %509 = vmatprep.subr.bf16.mxu0 %v478
        %510 = vmatpush1.bf16.msra.mxu0 %v477
        %511 = vmatprep.subr.bf16.mxu0 %v480
        %512 = vmatpush1.bf16.msra.mxu0 %v479
        %513 = vmatprep.subr.bf16.mxu0 %v482
        %514 = vmatpush1.bf16.msra.mxu0 %v481
        %515 = vmatprep.subr.bf16.mxu0 %v484
        %516 = vmatpush1.bf16.msra.mxu0 %v483
        %517 = vmatprep.subr.bf16.mxu0 %v486
        %518 = vmatpush1.bf16.msra.mxu0 %v485
        %519 = vmatprep.subr.bf16.mxu0 %v488
        %520 = vmatpush1.bf16.msra.mxu0 %v487
        %521 = vmatprep.subr.bf16.mxu0 %v490
        %522 = vmatpush1.bf16.msra.mxu0 %v489
        %523 = vmatprep.subr.bf16.mxu0 %v492
        %524 = vmatpush1.bf16.msra.mxu0 %v491
        %525 = vmatprep.subr.bf16.mxu0 0
        %526 = vmatpush1.bf16.msra.mxu0 0
        %527 = vmatprep.subr.bf16.mxu0 0
        %528 = vmatpush1.bf16.msra.mxu0 0
        %529 = vmatprep.subr.bf16.mxu0 0
        %530 = vmatpush1.bf16.msra.mxu0 0
        %531 = vmatprep.subr.bf16.mxu0 0
        %532 = vmatpush1.bf16.msra.mxu0 0
        %533 = vmatprep.subr.bf16.mxu0 0
        %534 = vmatpush1.bf16.msra.mxu0 0
        %535 = vmatprep.subr.bf16.mxu0 0
        %536 = vmatpush1.bf16.msra.mxu0 0
        %537 = vmatprep.subr.bf16.mxu0 0
        %538 = vmatpush1.bf16.msra.mxu0 0
        %539 = vmatprep.subr.bf16.mxu0 0
        %540 = vmatpush1.bf16.msra.mxu0 0
        %541 = vmatprep.mubr.bf16.mxu0 0
        %542 = vmatmul.mubr.bf16.gmra.mrb[0].mxu0 %v396
        %v543 = vpop.f32.mrb[0].mxu0
        %v544 = vadd.f32 0.0, %v543
        %v545 = vpop.f32.mrb[0].mxu0
        %v546 = vadd.f32 0.0, %v545
        %v547 = vpop.f32.mrb[0].mxu0
        %v548 = vpop.f32.mrb[0].mxu0
        %549 = vdwg.mxu0
        %v566 = vunpack.c.l.b16 %v397
        %v567 = vunpack.c.h.b16 %v397
        %v568 = vunpack.c.l.b16 %v398
        %v569 = vunpack.c.h.b16 %v398
        %v570 = vunpack.c.l.b16 %v399
        %v571 = vunpack.c.h.b16 %v399
        %v572 = vunpack.c.l.b16 %v400
        %v573 = vunpack.c.h.b16 %v400
        %v574 = vunpack.c.l.b16 %v401
        %v575 = vunpack.c.h.b16 %v401
        %v576 = vunpack.c.l.b16 %v402
        %v577 = vunpack.c.h.b16 %v402
        %v578 = vunpack.c.l.b16 %v403
        %v579 = vunpack.c.h.b16 %v403
        %v580 = vunpack.c.l.b16 %v404
        %v581 = vunpack.c.h.b16 %v404
        %v582 = vunpack.c.l.b16 %v405
        %v583 = vunpack.c.h.b16 %v405
        %v584 = vunpack.c.l.b16 %v406
        %v585 = vunpack.c.h.b16 %v406
        %v586 = vunpack.c.l.b16 %v407
        %v587 = vunpack.c.h.b16 %v407
        %v588 = vunpack.c.l.b16 %v408
        %v589 = vunpack.c.h.b16 %v408
        %v590 = vunpack.c.l.b16 %v409
        %v591 = vunpack.c.h.b16 %v409
        %v592 = vunpack.c.l.b16 %v410
        %v593 = vunpack.c.h.b16 %v410
        %v594 = vunpack.c.l.b16 %v411
        %v595 = vunpack.c.h.b16 %v411
        %v596 = vunpack.c.l.b16 %v412
        %v597 = vunpack.c.h.b16 %v412
        %v598 = vpack.c.b16 %v568, %v566
        %v599 = vpack.c.b16 %v569, %v567
        %v600 = vpack.c.b16 %v572, %v570
        %v601 = vpack.c.b16 %v573, %v571
        %v602 = vpack.c.b16 %v576, %v574
        %v603 = vpack.c.b16 %v577, %v575
        %v604 = vpack.c.b16 %v580, %v578
        %v605 = vpack.c.b16 %v581, %v579
        %v606 = vpack.c.b16 %v584, %v582
        %v607 = vpack.c.b16 %v585, %v583
        %v608 = vpack.c.b16 %v588, %v586
        %v609 = vpack.c.b16 %v589, %v587
        %v610 = vpack.c.b16 %v592, %v590
        %v611 = vpack.c.b16 %v593, %v591
        %v612 = vpack.c.b16 %v596, %v594
        %v613 = vpack.c.b16 %v597, %v595
        %630 = vmatprep.subr.bf16.mxu0 %v599
        %631 = vmatpush1.bf16.msra.mxu0 %v598
        %632 = vmatprep.subr.bf16.mxu0 %v601
        %633 = vmatpush1.bf16.msra.mxu0 %v600
        %634 = vmatprep.subr.bf16.mxu0 %v603
        %635 = vmatpush1.bf16.msra.mxu0 %v602
        %636 = vmatprep.subr.bf16.mxu0 %v605
        %637 = vmatpush1.bf16.msra.mxu0 %v604
        %638 = vmatprep.subr.bf16.mxu0 %v607
        %639 = vmatpush1.bf16.msra.mxu0 %v606
        %640 = vmatprep.subr.bf16.mxu0 %v609
        %641 = vmatpush1.bf16.msra.mxu0 %v608
        %642 = vmatprep.subr.bf16.mxu0 %v611
        %643 = vmatpush1.bf16.msra.mxu0 %v610
        %644 = vmatprep.subr.bf16.mxu0 %v613
        %645 = vmatpush1.bf16.msra.mxu0 %v612
        %646 = vmatprep.subr.bf16.mxu0 0
        %647 = vmatpush1.bf16.msra.mxu0 0
        %648 = vmatprep.subr.bf16.mxu0 0
        %649 = vmatpush1.bf16.msra.mxu0 0
        %650 = vmatprep.subr.bf16.mxu0 0
        %651 = vmatpush1.bf16.msra.mxu0 0
        %652 = vmatprep.subr.bf16.mxu0 0
        %653 = vmatpush1.bf16.msra.mxu0 0
        %654 = vmatprep.subr.bf16.mxu0 0
        %655 = vmatpush1.bf16.msra.mxu0 0
        %656 = vmatprep.subr.bf16.mxu0 0
        %657 = vmatpush1.bf16.msra.mxu0 0
        %658 = vmatprep.subr.bf16.mxu0 0
        %659 = vmatpush1.bf16.msra.mxu0 0
        %660 = vmatprep.subr.bf16.mxu0 0
        %661 = vmatpush1.bf16.msra.mxu0 0
        %662 = vmatprep.mubr.bf16.mxu0 0
        %663 = vmatmul.mubr.bf16.gmra.mrb[0].mxu0 %v394
        %v664 = vpop.f32.mrb[0].mxu0
        %v665 = vadd.f32 %v544, %v664
        %v666 = vpop.f32.mrb[0].mxu0
        %v667 = vadd.f32 %v546, %v666
        %v668 = vpop.f32.mrb[0].mxu0
        %v669 = vpop.f32.mrb[0].mxu0
        %670 = vdwg.mxu0
        %v671 = vld [vmem:[#allocation12] sm:$0x3]
        %v673 = vlaneseq
        %v674 = vshrl.u32 %v673, 7
        %v675 = vsub.s32 0, %v674
        %v676 = vrot.slane %v671, %v675
        %v677 = vlaneseq
        %v678 = vshrl.u32 %v677, 7
        %v679 = vsub.s32 1, %v678
        %v680 = vrot.slane %v671, %v679
        %v683 = vadd.f32 %v665, %v676
        %v684 = vadd.f32 %v667, %v680
        %685 = vst [vmem:[#allocation14] sm:$0xff] %v683
        %686 = vmax.xlane.f32.xlu0 %v684
        %v687 = vpop.xlane.xlu0 %686
        %v688 = vsub.f32 %v684, %v687
        %v689 = vmul.f32 %v688, 1.442695
        %v690 = vpow.pop %v689
        %691 = vadd.xlane.f32.xlu0 %v690
        %v692 = vpop.xlane.xlu0 %691
        %v693 = vlog2.pop %v692
        %v694 = vmul.f32 %v693, 0.6931472
        %v695 = vsub.f32 %v688, %v694
        %696 = vst [vmem:[%s381] sm:$0xff] %v695
        %s697 = sand.u32 %s189, 1
        %s698 = scalar_lea.sflag [#allocation6], %s697
        %s699 = sand.u32 %s189, 1
        %s700 = smul.addr %s699, 8
        %s701 = scalar_lea.vmem [#allocation13], %s700
        // Predicated region
        $region65: #{_rnn_seq_call.1} parent=39 // pred_check
          %p702 = pneg %p199
        $region66: #{_rnn_seq_call.1} parent=39 // pred_check_branch
          %704 = sbr.rel (%p702) target = $region68
        $region67: #{_rnn_seq_call.1} parent=39 // pred_region
          %s706 = ssub.s32 128, 128
          %707 = vsyncadd %s698, %s706
          %s708 = sadd.s32 %s33, %s34
          %s709 = smul.addr %s708, 128
          %s710 = scalar_lea.hbm %s6, %s709
          %s712 = sshll.u32 %s701, 4
          %s713 = int_to_ptr.vmem [resolvable:$true] %s712
          %715 = dma.vmem_to_hbm [thread:$0]  %s713, 128, %s710, %s698
        $region68: #{_rnn_seq_call.1} parent=39 // pred_fallthru
          _
        // Predicated region
        $region69: #{_rnn_seq_call.1} parent=39 // pred_check
          %p716 = pneg %p225
        $region70: #{_rnn_seq_call.1} parent=39 // pred_check_branch
          %718 = sbr.rel (%p716) target = $region72
        $region71: #{_rnn_seq_call.1} parent=39 // pred_region
          %s720 = ssub.s32 128, 128
          %721 = vsyncadd [#allocation15], %s720
          %s722 = smul.addr %s33, 128
          %s723 = scalar_lea.hbm %s7, %s722
          %s725 = sshll.u32 [#allocation14], 4
          %s726 = int_to_ptr.vmem [resolvable:$true] %s725
          %728 = dma.vmem_to_hbm [thread:$0]  %s726, 128, %s723, [#allocation15]
        $region72: #{_rnn_seq_call.1} parent=39 // pred_fallthru
          _
        // Predicated region
        $region73: #{_rnn_seq_call.1} parent=39 // pred_check
          %p729 = pneg %p225
        $region74: #{_rnn_seq_call.1} parent=39 // pred_check_branch
          %731 = sbr.rel (%p729) target = $region76
        $region75: #{_rnn_seq_call.1} parent=39 // pred_region
          %732 = dma.done [#allocation15], 128
        $region76: #{_rnn_seq_call.1} parent=39 // pred_fallthru
          _
      $region40: #{_rnn_seq_call.1} parent=5 // pred_fallthru
        _
      %p733 = scmp.le.s32.totalorder 2, %s24
      // Predicated region
      $region77: #{_rnn_seq_call.1} parent=5 // pred_check
        %p734 = pneg %p733
      $region78: #{_rnn_seq_call.1} parent=5 // pred_check_branch
        %736 = sbr.rel (%p734) target = $region80
      $region79: #{_rnn_seq_call.1} parent=5 // pred_region
        %s737 = ssub.s32 %s24, 2
        // Predicated region
        $region81: #{_rnn_seq_call.1} parent=79 // pred_check
          %p738 = pneg %p205
        $region82: #{_rnn_seq_call.1} parent=79 // pred_check_branch
          %740 = sbr.rel (%p738) target = $region84
        $region83: #{_rnn_seq_call.1} parent=79 // pred_region
          %s741 = sand.u32 %s190, 1
          %s742 = scalar_lea.sflag [#allocation6], %s741
          %s743 = sand.u32 %s190, 1
          %s744 = smul.addr %s743, 8
          %s745 = scalar_lea.vmem [#allocation13], %s744
          %746 = dma.done %s742, 128
        $region84: #{_rnn_seq_call.1} parent=79 // pred_fallthru
          _
      $region80: #{_rnn_seq_call.1} parent=5 // pred_fallthru
        _
    $region6: #{_rnn_seq_call.1} parent=1 // loop_footer
      %s28 = sadd.s32 1, %s24
    $region7: #{_rnn_seq_call.1} parent=1 // loop_footer_branch
      %23 = sbr.rel target = $region3
    $region8: #{_rnn_seq_call.1} parent=1 // loop_exit
      _
    %747 = vsyncpa [#allocation5], 1
    %s748 = scalar_lea.sflag [#allocation5], 1
    %749 = vsyncpa %s748, 1
    %750 = vsyncpa [#allocation8], 1
    %751 = vsyncpa [#allocation11], 1
    %752 = vsyncpa [#allocation6], 1
    %s753 = scalar_lea.sflag [#allocation6], 1
    %754 = vsyncpa %s753, 1
    %755 = vsyncpa [#allocation15], 1

</llo_original>
